<compile_context>
chip_gen: v5e
topology: v5e:2x2
jax: 0.10.0
libtpu: 0.0.40
codegen_flags: <defaults>
</compile_context>

<pallas_src>
import functools
import math

import jax
import jax.numpy as jnp
from jax import lax
from jax.experimental import pallas as pl
from jax.experimental.pallas import tpu as pltpu


def _selective_exp_kernel(x_ref, o_ref, *, s, e, d):
    x = x_ref[...]
    # Column index along the lane-dense axis; original last-dim index = col % d
    # (valid because the lane width L is a multiple of d).
    col = lax.broadcasted_iota(jnp.int32, x.shape, dimension=x.ndim - 1)
    sub = col % d
    mask = (sub >= s) & (sub < e)
    o_ref[...] = jnp.where(mask, jnp.exp(x), x)


def selective_exp(x, start, end):
    """Returns a new array equal to x with exp applied to x[..., start:end]."""
    orig_shape = x.shape
    d = orig_shape[-1]
    total = x.size
    itemsize = jnp.dtype(x.dtype).itemsize

    # Lane width: multiple of 128 (lane-dense, unmasked stores) and of d
    # (so the slice mask is periodic with period d along the lane axis).
    base = (d * 128) // math.gcd(d, 128)
    lane_w = base
    while lane_w < 1024 and lane_w * 2 <= max(total, base):
        lane_w *= 2

    rows = pl.cdiv(total, lane_w)

    # ~4 MiB tiles: 2 arrays x 2 pipeline buffers -> ~16 MiB live in VMEM,
    # which fits the 32 MiB scoped limit requested below on v5e/v6e/v7x.
    max_tile_rows = max(8, (4 * 1024 * 1024) // (lane_w * itemsize))

    if rows <= max_tile_rows:
        tr = rows  # single block covering the full (padded) array — always legal
    else:
        tr = max(8, (max_tile_rows // 8) * 8)     # sublane-divisible tile rows
        rows = ((rows + tr - 1) // tr) * tr       # pad rows to a multiple of tr

    padded_total = rows * lane_w
    flat = x.reshape(-1)
    if padded_total != total:
        flat = jnp.pad(flat, (0, padded_total - total))
    x2 = flat.reshape(rows, lane_w)

    kernel = functools.partial(_selective_exp_kernel, s=start, e=end, d=d)

    out2 = pl.pallas_call(
        kernel,
        out_shape=jax.ShapeDtypeStruct((rows, lane_w), x.dtype),
        grid_spec=pltpu.PrefetchScalarGridSpec(
            num_scalar_prefetch=0,
            grid=(rows // tr,),
            in_specs=[pl.BlockSpec((tr, lane_w), lambda i: (i, 0))],
            out_specs=pl.BlockSpec((tr, lane_w), lambda i: (i, 0)),
        ),
        compiler_params=pltpu.CompilerParams(
            dimension_semantics=("parallel",),
            vmem_limit_bytes=32 * 1024 * 1024,
        ),
    )(x2)

    out_flat = out2.reshape(-1)
    if padded_total != total:
        out_flat = out_flat[:total]
    return out_flat.reshape(orig_shape)


if __name__ == "__main__":
    key = jax.random.PRNGKey(0)
    start, end = 4, 12  # SelectiveExp(start=4, end=12)

    # Primary NCHW demo input.
    x = jax.random.normal(key, (2, 4, 16, 16), dtype=jnp.float32)
    out = jax.block_until_ready(selective_exp(x, start, end))
    ref = x.at[..., start:end].set(jnp.exp(x[..., start:end]))
    assert out.shape == x.shape and out.dtype == x.dtype
    assert jnp.allclose(out, ref, atol=1e-6, rtol=1e-6)

    # Ragged leading dims (exercises the padding path instead of hard-failing).
    key2 = jax.random.PRNGKey(1)
    y = jax.random.normal(key2, (3, 5, 16), dtype=jnp.float32)
    out_y = jax.block_until_ready(selective_exp(y, start, end))
    ref_y = y.at[..., start:end].set(jnp.exp(y[..., start:end]))
    assert jnp.allclose(out_y, ref_y, atol=1e-6, rtol=1e-6)

    print("KERNEL_OK")
</pallas_src>

<mosaic_0001>
module attributes {stable_mosaic.version = 11 : i64} {
  func.func @_selective_exp_kernel(%arg0: i32, %arg1: memref<2x1024xf32, #tpu.memory_space<vmem>>, %arg2: memref<2x1024xf32, #tpu.memory_space<vmem>>) attributes {dimension_semantics = [#tpu.dimension_semantics<parallel>], iteration_bounds = array<i64: 1>, scalar_prefetch = 0 : i64, scratch_operands = 0 : i64, tpu.core_type = #tpu.core_type<tc>, window_params = [{transform_indices = @transform_0, window_bounds = array<i64: 2, 1024>}, {transform_indices = @transform_1, window_bounds = array<i64: 2, 1024>}]} {
    %c0 = arith.constant 0 : index
    %c0_0 = arith.constant 0 : index
    %0 = vector.load %arg1[%c0, %c0_0] : memref<2x1024xf32, #tpu.memory_space<vmem>>, vector<2x1024xf32>
    %1 = tpu.iota {dimensions = array<i32: 1>} : vector<2x1024xi32>
    %c16_i32 = arith.constant 16 : i32
    %c0_i32 = arith.constant 0 : i32
    %2 = arith.cmpi eq, %c16_i32, %c0_i32 : i32
    %c1_i32 = arith.constant 1 : i32
    %3 = arith.select %2, %c1_i32, %c16_i32 : i32
    %4 = vector.broadcast %3 : i32 to vector<2x1024xi32>
    %5 = arith.remsi %1, %4 : vector<2x1024xi32>
    %c0_i32_1 = arith.constant 0 : i32
    %6 = vector.broadcast %c0_i32_1 : i32 to vector<2x1024xi32>
    %7 = arith.cmpi ne, %5, %6 : vector<2x1024xi32>
    %c0_i32_2 = arith.constant 0 : i32
    %8 = vector.broadcast %c0_i32_2 : i32 to vector<2x1024xi32>
    %9 = arith.cmpi slt, %5, %8 : vector<2x1024xi32>
    %c0_i32_3 = arith.constant 0 : i32
    %10 = arith.cmpi slt, %3, %c0_i32_3 : i32
    %11 = vector.broadcast %10 : i1 to vector<2x1024xi1>
    %12 = vector.broadcast %11 : vector<2x1024xi1> to vector<2x1024xi1>
    %13 = arith.xori %9, %12 : vector<2x1024xi1>
    %14 = arith.andi %13, %7 : vector<2x1024xi1>
    %15 = vector.broadcast %3 : i32 to vector<2x1024xi32>
    %16 = arith.addi %5, %15 : vector<2x1024xi32>
    %17 = arith.select %14, %16, %5 : vector<2x1024xi1>, vector<2x1024xi32>
    %c4_i32 = arith.constant 4 : i32
    %18 = vector.broadcast %c4_i32 : i32 to vector<2x1024xi32>
    %19 = arith.cmpi sge, %17, %18 : vector<2x1024xi32>
    %c12_i32 = arith.constant 12 : i32
    %20 = vector.broadcast %c12_i32 : i32 to vector<2x1024xi32>
    %21 = arith.cmpi slt, %17, %20 : vector<2x1024xi32>
    %22 = arith.andi %19, %21 : vector<2x1024xi1>
    %23 = math.exp %0 : vector<2x1024xf32>
    %24 = arith.select %22, %23, %0 : vector<2x1024xi1>, vector<2x1024xf32>
    %c0_4 = arith.constant 0 : index
    %c0_5 = arith.constant 0 : index
    %25 = vector.load %arg2[%c0_4, %c0_5] : memref<2x1024xf32, #tpu.memory_space<vmem>>, vector<2x1024xf32>
    tpu.vector_store %arg2[%c0_4, %c0_5], %24 {strides = array<i32>} : memref<2x1024xf32, #tpu.memory_space<vmem>>, vector<2x1024xf32>,
    return
  }
  func.func @transform_0(%arg0: i32) -> (i32, i32) {
    %c0_i32 = arith.constant 0 : i32
    %c0_i32_0 = arith.constant 0 : i32
    return %arg0, %c0_i32 : i32, i32
  }
  func.func @transform_1(%arg0: i32) -> (i32, i32) {
    %c0_i32 = arith.constant 0 : i32
    %c0_i32_0 = arith.constant 0 : i32
    return %arg0, %c0_i32 : i32, i32
  }
}

</mosaic_0001>

<llo_original>
// kernel: tpu_custom_call.1
$region0: #{tpu_custom_call.1}
  #allocation0 [shape = 'u32[]', space=smem, size = 0x4, offset = 0x4, fixed_abs, tag = 'smem constant byte address 0x4 - core index']
  #allocation1 [shape = 'u32[72,128]{1,0:T(1,128)}', space=vmem, size = 0x9000, scoped, tag = 'internal scratch']
  %s0 = inlined_call_operand.hbm [shape: f32[2,1024], index: 0, kind: input, shape index: {}]
  %s1 = inlined_call_operand.hbm [shape: f32[2,1024], index: 1, kind: output, shape index: {}]
  %s2 = sld [smem:[#allocation0]]
  $region18: #{tpu_custom_call.1} parent=0
    _
  %s4 = ssub.s32 1, %s2
  %s5 = scalar_select 0, %s4, %s2
  $region1: #{tpu_custom_call.1} parent=0
    #allocation2 [shape = 'u8[8192]{0}', space=vmem, size = 0x2000, scoped, tag = 'input window, operand 0, single buffered']
    #allocation3 [shape = 's32[1]{0}', space=sflag, size = 0x4, scoped, tag = 'scoped memory for tpu_custom_call.1']
    #allocation4 [shape = 's32[1]{0}', space=sflag, size = 0x4, scoped, tag = 'scoped memory for tpu_custom_call.1']
    #allocation5 [shape = 'u8[8192]{0}', space=vmem, size = 0x2000, scoped, tag = 'output window, operand 0, single buffered']
    %6 = vsyncpa [#allocation3], 0
    %7 = vsyncpa [#allocation4], 0
    // Predicated region
    $region2: #{tpu_custom_call.1} parent=1 // pred_check
      _
    $region3: #{tpu_custom_call.1} parent=1 // pred_check_branch
      %9 = sbr.rel (0) target = $region5
    $region4: #{tpu_custom_call.1} parent=1 // pred_region
      %11 = vsyncadd [#allocation3], 0
      %s13 = sshll.u32 %s0, 4
      %s14 = int_to_ptr.hbm [resolvable:$true] %s13
      %s15 = sshll.u32 [#allocation2], 4
      %s16 = int_to_ptr.vmem [resolvable:$true] %s15
      %18 = dma.hbm_to_vmem [thread:$0]  %s14, 256, %s16, [#allocation3]
    $region5: #{tpu_custom_call.1} parent=1 // pred_fallthru
      _
    // Predicated region
    $region6: #{tpu_custom_call.1} parent=1 // pred_check
      _
    $region7: #{tpu_custom_call.1} parent=1 // pred_check_branch
      %20 = sbr.rel (0) target = $region9
    $region8: #{tpu_custom_call.1} parent=1 // pred_region
      %22 = dma.done [#allocation3], 256
    $region9: #{tpu_custom_call.1} parent=1 // pred_fallthru
      _
    %v23 = vld [vmem:[#allocation2] sm:$0xff]
    %v24 = vld [vmem:[#allocation2 + $0x8] sm:$0xff]
    %v25 = vlaneseq
    %v26 = vand.u32 %v25, 127
    %v27 = vadd.s32 %v26, 128
    %v28 = vadd.s32 %v26, 256
    %v29 = vadd.s32 %v26, 384
    %v30 = vadd.s32 %v26, 512
    %v31 = vadd.s32 %v26, 640
    %v32 = vadd.s32 %v26, 768
    %v33 = vadd.s32 %v26, 896
    %vm34 = vcmp.lt.s32.totalorder %v26, 0
    %v35 = vsub.s32 0, %v26
    %v36 = vsel %vm34, %v35, %v26
    %v37 = vshrl.u32 %v36, 4
    %v38 = vand.u32 %v36, 15
    %v39 = vsub.s32 0, %v38
    %v40 = vsel %vm34, %v39, %v38
    %vm41 = vcmp.lt.s32.totalorder %v27, 0
    %v42 = vsub.s32 0, %v27
    %v43 = vsel %vm41, %v42, %v27
    %v44 = vshrl.u32 %v43, 4
    %v45 = vand.u32 %v43, 15
    %v46 = vsub.s32 0, %v45
    %v47 = vsel %vm41, %v46, %v45
    %vm48 = vcmp.lt.s32.totalorder %v28, 0
    %v49 = vsub.s32 0, %v28
    %v50 = vsel %vm48, %v49, %v28
    %v51 = vshrl.u32 %v50, 4
    %v52 = vand.u32 %v50, 15
    %v53 = vsub.s32 0, %v52
    %v54 = vsel %vm48, %v53, %v52
    %vm55 = vcmp.lt.s32.totalorder %v29, 0
    %v56 = vsub.s32 0, %v29
    %v57 = vsel %vm55, %v56, %v29
    %v58 = vshrl.u32 %v57, 4
    %v59 = vand.u32 %v57, 15
    %v60 = vsub.s32 0, %v59
    %v61 = vsel %vm55, %v60, %v59
    %vm62 = vcmp.lt.s32.totalorder %v30, 0
    %v63 = vsub.s32 0, %v30
    %v64 = vsel %vm62, %v63, %v30
    %v65 = vshrl.u32 %v64, 4
    %v66 = vand.u32 %v64, 15
    %v67 = vsub.s32 0, %v66
    %v68 = vsel %vm62, %v67, %v66
    %vm69 = vcmp.lt.s32.totalorder %v31, 0
    %v70 = vsub.s32 0, %v31
    %v71 = vsel %vm69, %v70, %v31
    %v72 = vshrl.u32 %v71, 4
    %v73 = vand.u32 %v71, 15
    %v74 = vsub.s32 0, %v73
    %v75 = vsel %vm69, %v74, %v73
    %vm76 = vcmp.lt.s32.totalorder %v32, 0
    %v77 = vsub.s32 0, %v32
    %v78 = vsel %vm76, %v77, %v32
    %v79 = vshrl.u32 %v78, 4
    %v80 = vand.u32 %v78, 15
    %v81 = vsub.s32 0, %v80
    %v82 = vsel %vm76, %v81, %v80
    %vm83 = vcmp.lt.s32.totalorder %v33, 0
    %v84 = vsub.s32 0, %v33
    %v85 = vsel %vm83, %v84, %v33
    %v86 = vshrl.u32 %v85, 4
    %v87 = vand.u32 %v85, 15
    %v88 = vsub.s32 0, %v87
    %v89 = vsel %vm83, %v88, %v87
    %vm90 = vcmp.ne.s32.totalorder %v40, 0
    %vm91 = vcmp.ne.s32.totalorder %v47, 0
    %vm92 = vcmp.ne.s32.totalorder %v54, 0
    %vm93 = vcmp.ne.s32.totalorder %v61, 0
    %vm94 = vcmp.ne.s32.totalorder %v68, 0
    %vm95 = vcmp.ne.s32.totalorder %v75, 0
    %vm96 = vcmp.ne.s32.totalorder %v82, 0
    %vm97 = vcmp.ne.s32.totalorder %v89, 0
    %vm98 = vcmp.lt.s32.totalorder %v40, 0
    %vm99 = vcmp.lt.s32.totalorder %v47, 0
    %vm100 = vcmp.lt.s32.totalorder %v54, 0
    %vm101 = vcmp.lt.s32.totalorder %v61, 0
    %vm102 = vcmp.lt.s32.totalorder %v68, 0
    %vm103 = vcmp.lt.s32.totalorder %v75, 0
    %vm104 = vcmp.lt.s32.totalorder %v82, 0
    %vm105 = vcmp.lt.s32.totalorder %v89, 0
    %vm106 = vmand %vm98, %vm90
    %vm107 = vmand %vm99, %vm91
    %vm108 = vmand %vm100, %vm92
    %vm109 = vmand %vm101, %vm93
    %vm110 = vmand %vm102, %vm94
    %vm111 = vmand %vm103, %vm95
    %vm112 = vmand %vm104, %vm96
    %vm113 = vmand %vm105, %vm97
    %v114 = vadd.s32 %v40, 16
    %v115 = vadd.s32 %v47, 16
    %v116 = vadd.s32 %v54, 16
    %v117 = vadd.s32 %v61, 16
    %v118 = vadd.s32 %v68, 16
    %v119 = vadd.s32 %v75, 16
    %v120 = vadd.s32 %v82, 16
    %v121 = vadd.s32 %v89, 16
    %v122 = vsel %vm106, %v114, %v40
    %v123 = vsel %vm107, %v115, %v47
    %v124 = vsel %vm108, %v116, %v54
    %v125 = vsel %vm109, %v117, %v61
    %v126 = vsel %vm110, %v118, %v68
    %v127 = vsel %vm111, %v119, %v75
    %v128 = vsel %vm112, %v120, %v82
    %v129 = vsel %vm113, %v121, %v89
    %vm130 = vcmp.ge.s32.totalorder %v122, 4
    %vm131 = vcmp.ge.s32.totalorder %v123, 4
    %vm132 = vcmp.ge.s32.totalorder %v124, 4
    %vm133 = vcmp.ge.s32.totalorder %v125, 4
    %vm134 = vcmp.ge.s32.totalorder %v126, 4
    %vm135 = vcmp.ge.s32.totalorder %v127, 4
    %vm136 = vcmp.ge.s32.totalorder %v128, 4
    %vm137 = vcmp.ge.s32.totalorder %v129, 4
    %vm138 = vcmp.lt.s32.totalorder %v122, 12
    %vm139 = vcmp.lt.s32.totalorder %v123, 12
    %vm140 = vcmp.lt.s32.totalorder %v124, 12
    %vm141 = vcmp.lt.s32.totalorder %v125, 12
    %vm142 = vcmp.lt.s32.totalorder %v126, 12
    %vm143 = vcmp.lt.s32.totalorder %v127, 12
    %vm144 = vcmp.lt.s32.totalorder %v128, 12
    %vm145 = vcmp.lt.s32.totalorder %v129, 12
    %vm146 = vmand %vm130, %vm138
    %vm147 = vmand %vm131, %vm139
    %vm148 = vmand %vm132, %vm140
    %vm149 = vmand %vm133, %vm141
    %vm150 = vmand %vm134, %vm142
    %vm151 = vmand %vm135, %vm143
    %vm152 = vmand %vm136, %vm144
    %vm153 = vmand %vm137, %vm145
    %v154 = vmul.f32 %v23, 1.442695
    %v155 = vpow.pop %v154
    %v156 = vmul.f32 %v24, 1.442695
    %v157 = vpow.pop %v156
    %160 = vst [vmem:[#allocation1] ss:$4 sm:$0xff] %v155
    %s161 = scalar_lea.vmem [#allocation1], 32
    %162 = vst [vmem:[%s161] ss:$4 sm:$0xff] %v157
    %v163 = vld.sshfl [vmem:[#allocation1] sm:$0xff pattern:$0x73625140]
    %v164 = vld.sshfl [vmem:[#allocation1 + $0x8] sm:$0xff pattern:$0x73625140]
    %v165 = vld.sshfl [vmem:[#allocation1 + $0x10] sm:$0xff pattern:$0x73625140]
    %v166 = vld.sshfl [vmem:[#allocation1 + $0x18] sm:$0xff pattern:$0x73625140]
    %v167 = vld.sshfl [vmem:[#allocation1 + $0x20] sm:$0xff pattern:$0x73625140]
    %v168 = vld.sshfl [vmem:[#allocation1 + $0x28] sm:$0xff pattern:$0x73625140]
    %v169 = vld.sshfl [vmem:[#allocation1 + $0x30] sm:$0xff pattern:$0x73625140]
    %v170 = vld.sshfl [vmem:[#allocation1 + $0x38] sm:$0xff pattern:$0x73625140]
    %181 = vst [vmem:[#allocation1] ss:$4 sm:$0xff] %v23
    %s182 = scalar_lea.vmem [#allocation1], 32
    %183 = vst [vmem:[%s182] ss:$4 sm:$0xff] %v24
    %v184 = vld.sshfl [vmem:[#allocation1] sm:$0xff pattern:$0x73625140]
    %v185 = vld.sshfl [vmem:[#allocation1 + $0x8] sm:$0xff pattern:$0x73625140]
    %v186 = vld.sshfl [vmem:[#allocation1 + $0x10] sm:$0xff pattern:$0x73625140]
    %v187 = vld.sshfl [vmem:[#allocation1 + $0x18] sm:$0xff pattern:$0x73625140]
    %v188 = vld.sshfl [vmem:[#allocation1 + $0x20] sm:$0xff pattern:$0x73625140]
    %v189 = vld.sshfl [vmem:[#allocation1 + $0x28] sm:$0xff pattern:$0x73625140]
    %v190 = vld.sshfl [vmem:[#allocation1 + $0x30] sm:$0xff pattern:$0x73625140]
    %v191 = vld.sshfl [vmem:[#allocation1 + $0x38] sm:$0xff pattern:$0x73625140]
    %v200 = vsel %vm146, %v163, %v184
    %v201 = vsel %vm147, %v164, %v185
    %v202 = vsel %vm148, %v165, %v186
    %v203 = vsel %vm149, %v166, %v187
    %v204 = vsel %vm150, %v167, %v188
    %v205 = vsel %vm151, %v168, %v189
    %v206 = vsel %vm152, %v169, %v190
    %v207 = vsel %vm153, %v170, %v191
    %v216 = vrot.slane %v201, 6
    %v217 = vrot.slane %v202, 4
    %v218 = vrot.slane %v203, 2
    %v219 = vrot.slane %v205, 6
    %v220 = vrot.slane %v206, 4
    %v221 = vrot.slane %v207, 2
    %vm222 = vcmask 1041408
    %v223 = vsel %vm222, %v200, %v216
    %vm224 = vcmask 1045508
    %v225 = vsel %vm224, %v217, %v218
    %vm226 = vcmask 1043456
    %v227 = vsel %vm226, %v223, %v225
    %v228 = vsel %vm222, %v204, %v219
    %v229 = vsel %vm224, %v220, %v221
    %v230 = vsel %vm226, %v228, %v229
    %233 = vst [vmem:[#allocation5] sm:$0xff] %v227
    %234 = vst [vmem:[#allocation5 + $0x8] sm:$0xff] %v230
    // Predicated region
    $region10: #{tpu_custom_call.1} parent=1 // pred_check
      _
    $region11: #{tpu_custom_call.1} parent=1 // pred_check_branch
      %236 = sbr.rel (0) target = $region13
    $region12: #{tpu_custom_call.1} parent=1 // pred_region
      %238 = vsyncadd [#allocation4], 0
      %s240 = sshll.u32 [#allocation5], 4
      %s241 = int_to_ptr.vmem [resolvable:$true] %s240
      %s242 = sshll.u32 %s1, 4
      %s243 = int_to_ptr.hbm [resolvable:$true] %s242
      %245 = dma.vmem_to_hbm [thread:$0]  %s241, 256, %s243, [#allocation4]
    $region13: #{tpu_custom_call.1} parent=1 // pred_fallthru
      _
    // Predicated region
    $region14: #{tpu_custom_call.1} parent=1 // pred_check
      _
    $region15: #{tpu_custom_call.1} parent=1 // pred_check_branch
      %247 = sbr.rel (0) target = $region17
    $region16: #{tpu_custom_call.1} parent=1 // pred_region
      %249 = dma.done [#allocation4], 256
    $region17: #{tpu_custom_call.1} parent=1 // pred_fallthru
      _
    %250 = vsyncpa [#allocation3], 1
    %251 = vsyncpa [#allocation4], 1

</llo_original>
